<compile_context>
chip_gen: v7x
topology: tpu7x:2x2x1
jax: 0.10.0
libtpu: 0.0.40
codegen_flags: <defaults>
</compile_context>

<pallas_src>
import numpy as np
import jax
import jax.numpy as jnp
from jax.experimental import pallas as pl
from jax.experimental.pallas import tpu as pltpu

# ----------------------------- cfg.TRAIN constants -----------------------------
TRAIN_BATCH_SIZE = 16                 # rois_per_image
TRAIN_FG_FRACTION = 0.25
TRAIN_FG_THRESH = 0.5
TRAIN_BG_THRESH_HI = 0.5
TRAIN_BG_THRESH_LO = 0.0
TRAIN_BBOX_NORMALIZE_MEANS = (0.0, 0.0, 0.0, 0.0)
TRAIN_BBOX_NORMALIZE_STDS = (0.1, 0.1, 0.2, 0.2)
TRAIN_BBOX_INSIDE_WEIGHTS = (1.0, 1.0, 1.0, 1.0)
TRAIN_BBOX_NORMALIZE_TARGETS_PRECOMPUTED = True
NUM_GT_PAD = 20                       # module hardcodes gt_boxes_append = (1, 20, 5)

ROIS_PER_IMAGE = int(TRAIN_BATCH_SIZE / 1)                          # num_images = 1
FG_ROIS_PER_IMAGE = max(1, int(np.round(TRAIN_FG_FRACTION * ROIS_PER_IMAGE)))

_LANE = 128

# baked compile-time constants for the targets kernel
_M = tuple(float(m) for m in TRAIN_BBOX_NORMALIZE_MEANS)
_IS = tuple(1.0 / float(s) for s in TRAIN_BBOX_NORMALIZE_STDS)
_IW = tuple(float(w) for w in TRAIN_BBOX_INSIDE_WEIGHTS)

_VMEM_SPEC = pl.BlockSpec(memory_space=pltpu.MemorySpace.VMEM)       # whole array resident in VMEM


def _round_up(x, m):
    return ((x + m - 1) // m) * m


# ----------------------------- Pallas kernels ----------------------------------
def overlaps_kernel(rois_ref, gt_ref, out_ref):
    """IoU of N rois (lanes) vs K gt boxes (sublanes) for the whole batch, one step.

    Matches bbox_overlaps_batch semantics: zero-size gt -> overlap 0, zero-size roi -> -1.
    Output packed (B, 8, N): row0 = max over gt, row1 = argmax (as f32), rows 2..7 zero.
    """
    rois = rois_ref[...]          # (B, 4, N)   coords on sublanes, rois on lanes
    gt = gt_ref[...]              # (B, K, 4)
    B, _, N = rois.shape
    K = gt.shape[1]

    ax1 = rois[:, 0:1, :]; ay1 = rois[:, 1:2, :]; ax2 = rois[:, 2:3, :]; ay2 = rois[:, 3:4, :]  # (B,1,N)
    gx1 = gt[:, :, 0:1]; gy1 = gt[:, :, 1:2]; gx2 = gt[:, :, 2:3]; gy2 = gt[:, :, 3:4]          # (B,K,1)

    an_w = ax2 - ax1 + 1.0
    an_h = ay2 - ay1 + 1.0
    gt_w = gx2 - gx1 + 1.0
    gt_h = gy2 - gy1 + 1.0
    an_area = an_w * an_h                         # (B,1,N)
    gt_area = gt_w * gt_h                         # (B,K,1)

    iw = jnp.maximum(jnp.minimum(ax2, gx2) - jnp.maximum(ax1, gx1) + 1.0, 0.0)   # (B,K,N)
    ih = jnp.maximum(jnp.minimum(ay2, gy2) - jnp.maximum(ay1, gy1) + 1.0, 0.0)
    inter = iw * ih
    ua = an_area + gt_area - inter
    ov = inter / ua                               # (B,K,N)

    gt_zero = jnp.logical_and(gt_w == 1.0, gt_h == 1.0)   # (B,K,1)
    an_zero = jnp.logical_and(an_w == 1.0, an_h == 1.0)   # (B,1,N)
    ov = jnp.where(gt_zero, 0.0, ov)
    ov = jnp.where(an_zero, -1.0, ov)

    max_ov = jnp.max(ov, axis=1, keepdims=True)                              # (B,1,N)
    row = jax.lax.broadcasted_iota(jnp.int32, (B, K, N), 1)
    amax = jnp.min(jnp.where(ov == max_ov, row, K), axis=1, keepdims=True)
    amax = jnp.minimum(amax, K - 1)                                          # clamp (tie-miss guard)

    out_ref[...] = jnp.concatenate(
        [max_ov, amax.astype(jnp.float32), jnp.zeros((B, 6, N), jnp.float32)], axis=1)


def targets_kernel(in_ref, out_ref):
    """bbox_transform_batch + normalization (baked constants) + fg masking + weights.

    Packed input (B, 16, R): rows 0..3 = ex rois, 4..7 = matched gt rois, 8 = labels.
    Packed output (B, 16, R): rows 0..3 = targets, 4..7 = inside_w, 8..11 = outside_w.
    """
    x = in_ref[...]                               # (B, 16, R)
    B = x.shape[0]
    R = x.shape[2]

    ex1 = x[:, 0:1, :]; ey1 = x[:, 1:2, :]; ex2 = x[:, 2:3, :]; ey2 = x[:, 3:4, :]
    gx1 = x[:, 4:5, :]; gy1 = x[:, 5:6, :]; gx2 = x[:, 6:7, :]; gy2 = x[:, 7:8, :]
    lab = x[:, 8:9, :]                            # (B,1,R)

    ew = ex2 - ex1 + 1.0; eh = ey2 - ey1 + 1.0
    ecx = ex1 + 0.5 * ew; ecy = ey1 + 0.5 * eh
    gw = gx2 - gx1 + 1.0; gh = gy2 - gy1 + 1.0
    gcx = gx1 + 0.5 * gw; gcy = gy1 + 0.5 * gh

    dx = ((gcx - ecx) / ew - _M[0]) * _IS[0]
    dy = ((gcy - ecy) / eh - _M[1]) * _IS[1]
    dw = (jnp.log(gw / ew) - _M[2]) * _IS[2]
    dh = (jnp.log(gh / eh) - _M[3]) * _IS[3]

    fg = (lab > 0.0).astype(jnp.float32)          # (B,1,R)  labels > 0 -> fg
    t = jnp.concatenate([dx, dy, dw, dh], axis=1) * fg                       # (B,4,R)
    inw = jnp.concatenate([fg * _IW[0], fg * _IW[1], fg * _IW[2], fg * _IW[3]], axis=1)
    outw = (inw > 0.0).astype(jnp.float32)

    out_ref[...] = jnp.concatenate([t, inw, outw, jnp.zeros((B, 4, R), jnp.float32)], axis=1)


# ----------------------------- Pallas wrappers (called inside jit) ----------------
def bbox_overlaps_max_batched(rois_xyxy, gt_xyxy):
    """rois_xyxy (B,N,4), gt_xyxy (B,K,4) -> (max_overlaps (B,N) f32, gt_assignment (B,N) i32)."""
    B, N, _ = rois_xyxy.shape
    N_pad = _round_up(max(N, _LANE), _LANE)

    rois_t = jnp.transpose(rois_xyxy.astype(jnp.float32), (0, 2, 1))        # (B,4,N)
    rois_t = jnp.pad(rois_t, ((0, 0), (0, 0), (0, N_pad - N)))              # zero pad -> ov = -1
    gt = gt_xyxy.astype(jnp.float32)

    packed = pl.pallas_call(
        overlaps_kernel,
        in_specs=[_VMEM_SPEC, _VMEM_SPEC],
        out_specs=_VMEM_SPEC,
        out_shape=jax.ShapeDtypeStruct((B, 8, N_pad), jnp.float32),
    )(rois_t, gt)

    max_ov = packed[:, 0, :N]
    gt_assign = packed[:, 1, :N].astype(jnp.int32)
    return max_ov, gt_assign


def compute_targets_batched(ex_rois, gt_rois, labels):
    """ex/gt (B,R,4), labels (B,R) -> bbox_targets, inside_w, outside_w each (B,R,4)."""
    B, R, _ = ex_rois.shape
    R_pad = _round_up(max(R, _LANE), _LANE)

    ex_t = jnp.transpose(ex_rois.astype(jnp.float32), (0, 2, 1))            # (B,4,R)
    gt_t = jnp.transpose(gt_rois.astype(jnp.float32), (0, 2, 1))            # (B,4,R)
    lab = labels.astype(jnp.float32)[:, None, :]                            # (B,1,R)
    packed_in = jnp.concatenate(
        [ex_t, gt_t, lab, jnp.zeros((B, 7, R), jnp.float32)], axis=1)       # (B,16,R)
    packed_in = jnp.pad(packed_in, ((0, 0), (0, 0), (0, R_pad - R)))

    packed_out = pl.pallas_call(
        targets_kernel,
        in_specs=[_VMEM_SPEC],
        out_specs=_VMEM_SPEC,
        out_shape=jax.ShapeDtypeStruct((B, 16, R_pad), jnp.float32),
    )(packed_in)

    tgt = jnp.transpose(packed_out[:, 0:4, :R], (0, 2, 1))
    inw = jnp.transpose(packed_out[:, 4:8, :R], (0, 2, 1))
    outw = jnp.transpose(packed_out[:, 8:12, :R], (0, 2, 1))
    return tgt, inw, outw


# ----------------------------- on-device fg/bg sampling ---------------------------
def _sample_one_image(max_ov, key):
    """On-device equivalent of the per-image np.random fg/bg sampling loop."""
    N = max_ov.shape[0]
    R = ROIS_PER_IMAGE

    fg_mask = max_ov >= TRAIN_FG_THRESH
    bg_mask = jnp.logical_and(max_ov < TRAIN_BG_THRESH_HI, max_ov >= TRAIN_BG_THRESH_LO)
    fg_num = jnp.sum(fg_mask.astype(jnp.int32))
    bg_num = jnp.sum(bg_mask.astype(jnp.int32))

    k1, k2, k3 = jax.random.split(key, 3)
    pos = jnp.arange(N, dtype=jnp.int32)
    slots = jnp.arange(R, dtype=jnp.int32)

    # fg positions in random order first (== permutation of fg indices), then non-fg
    fg_keys = jax.random.uniform(k1, (N,))
    fg_rand_order = jnp.argsort(jnp.where(fg_mask, -fg_keys, 2.0)).astype(jnp.int32)
    # fg / bg positions in ascending order first (for floor(rand*n) indexed sampling)
    fg_pos_asc = jnp.argsort(jnp.where(fg_mask, pos, pos + N)).astype(jnp.int32)
    bg_pos_asc = jnp.argsort(jnp.where(bg_mask, pos, pos + N)).astype(jnp.int32)

    # Case A: fg>0 and bg>0
    fg_this_a = jnp.minimum(FG_ROIS_PER_IMAGE, fg_num)
    u_bg = jax.random.uniform(k2, (R,))
    bg_rand = jnp.clip(jnp.floor(u_bg * bg_num.astype(jnp.float32)).astype(jnp.int32),
                       0, jnp.maximum(bg_num - 1, 0))
    bg_sel = bg_pos_asc[bg_rand]                                             # (R,)
    keep_a = jnp.where(slots < fg_this_a,
                       fg_rand_order[jnp.minimum(slots, N - 1)],
                       bg_sel[jnp.clip(slots - fg_this_a, 0, R - 1)])

    # Case B: fg>0, bg==0 -> R fg with replacement
    u_fg = jax.random.uniform(k3, (R,))
    fg_rand = jnp.clip(jnp.floor(u_fg * fg_num.astype(jnp.float32)).astype(jnp.int32),
                       0, jnp.maximum(fg_num - 1, 0))
    keep_b = fg_pos_asc[fg_rand]

    # Case C: bg>0, fg==0 -> R bg with replacement
    keep_c = bg_sel

    has_fg = fg_num > 0
    has_bg = bg_num > 0
    # TODO(synk): the original raises ValueError when fg_num==0 and bg_num==0; inside jit we
    # silently fall back to roi 0 with fg_cnt=0 instead (that state "should not happen").
    keep = jnp.where(jnp.logical_and(has_fg, has_bg), keep_a,
                     jnp.where(has_fg, keep_b, keep_c))
    fg_cnt = jnp.where(jnp.logical_and(has_fg, has_bg), fg_this_a,
                       jnp.where(has_fg, R, 0))
    return keep.astype(jnp.int32), fg_cnt.astype(jnp.int32)


# ----------------------------- fused jitted forward ------------------------------
@jax.jit
def _proposal_target_forward(all_rois, gt_boxes, gt_poses, key):
    B = all_rois.shape[0]
    R = ROIS_PER_IMAGE

    # append ground-truth boxes as extra proposals (batch-idx column of rois is 0)
    gt_boxes_append = jnp.zeros((B, NUM_GT_PAD, 5), gt_boxes.dtype)
    gt_boxes_append = gt_boxes_append.at[:, :, 1:5].set(gt_boxes[:, :, :4])
    all_rois = jnp.concatenate([all_rois, gt_boxes_append], axis=1)          # (B, N, 5)

    # ---- Pallas (single call, whole batch): IoU + max/argmax over gt boxes ----
    max_ov, gt_assign = bbox_overlaps_max_batched(all_rois[:, :, 1:5], gt_boxes[:, :, :4])

    labels_all = jnp.take_along_axis(gt_boxes[:, :, 4], gt_assign, axis=1)   # (B,N)
    poses_all = jnp.take_along_axis(gt_poses, gt_assign, axis=1)             # (B,N)

    # on-device fg/bg sampling (no host sync)
    keys = jax.random.split(key, B)
    keep, fg_cnt = jax.vmap(_sample_one_image)(max_ov, keys)                 # (B,R), (B,)

    lab = jnp.take_along_axis(labels_all, keep, axis=1)                      # (B,R)
    pos = jnp.take_along_axis(poses_all, keep, axis=1)                       # (B,R)
    is_fg = jnp.arange(R, dtype=jnp.int32)[None, :] < fg_cnt[:, None]
    lab = jnp.where(is_fg, lab, 0.0).astype(jnp.float32)
    pos = jnp.where(is_fg, pos, 0.0).astype(jnp.float32)

    rois = jnp.take_along_axis(all_rois, keep[:, :, None], axis=1)           # (B,R,5)
    rois = rois.at[:, :, 0].set(jnp.arange(B, dtype=rois.dtype)[:, None])
    ga_keep = jnp.take_along_axis(gt_assign, keep, axis=1)                   # (B,R)
    gt_sel = jnp.take_along_axis(gt_boxes[:, :, :4], ga_keep[:, :, None], axis=1)  # (B,R,4)

    # ---- Pallas (single call, whole batch): bbox_transform + normalize + weights ----
    tgt, inw, outw = compute_targets_batched(rois[:, :, 1:5], gt_sel, lab)

    return rois, lab, tgt, inw, outw, pos


# ----------------------------- module port ----------------------------------
class ProposalTargetLayerPallas:
    def __init__(self, nclasses, seed=0):
        self._num_classes = nclasses
        # TODO(synk): host np.random bit-parity of the original sampling loop is not preserved;
        # sampling now uses jax.random on-device (same distributional semantics, no D2H sync).
        self._key = jax.random.PRNGKey(seed)

    def forward(self, all_rois, gt_boxes, num_boxes, gt_poses):
        del num_boxes  # unused by the computation in the original forward as well
        self._key, sub = jax.random.split(self._key)
        return _proposal_target_forward(all_rois, gt_boxes, gt_poses, sub)


# ----------------------------- demo ----------------------------------
if __name__ == "__main__":
    key = jax.random.PRNGKey(0)
    k1, k2, k3, k4, k5, k6 = jax.random.split(key, 6)

    num_classes = 5
    img_size = 128.0
    num_prop = 44                         # proposals from RPN; +20 gt -> 64 total rois
    num_real_gt = 5

    # ground-truth boxes (1, 20, 5): [x1, y1, x2, y2, class], padded with zeros
    gxy = jax.random.uniform(k1, (num_real_gt, 2), minval=0.0, maxval=img_size - 40.0)
    gwh = jax.random.uniform(k2, (num_real_gt, 2), minval=12.0, maxval=36.0)
    gcls = jax.random.randint(k3, (num_real_gt, 1), 1, num_classes).astype(jnp.float32)
    gt_real = jnp.concatenate([gxy, gxy + gwh, gcls], axis=1)
    gt_boxes = jnp.zeros((1, NUM_GT_PAD, 5), jnp.float32).at[0, :num_real_gt, :].set(gt_real)

    # gt poses (1, 20)
    gt_poses = jnp.zeros((1, NUM_GT_PAD), jnp.float32).at[0, :num_real_gt].set(
        jax.random.uniform(k4, (num_real_gt,), minval=0.0, maxval=3.14))

    # proposals (1, num_prop, 5): [batch_idx, x1, y1, x2, y2]
    pxy = jax.random.uniform(k5, (num_prop, 2), minval=0.0, maxval=img_size - 40.0)
    pwh = jax.random.uniform(k6, (num_prop, 2), minval=8.0, maxval=36.0)
    all_rois = jnp.concatenate(
        [jnp.zeros((num_prop, 1), jnp.float32), pxy, pxy + pwh], axis=1)[None, :, :]

    num_boxes = jnp.array([num_real_gt], jnp.int32)

    layer = ProposalTargetLayerPallas(num_classes, seed=0)
    rois, labels, bbox_targets, bbox_inw, bbox_outw, poses = layer.forward(
        all_rois, gt_boxes, num_boxes, gt_poses)

    jax.block_until_ready((rois, labels, bbox_targets, bbox_inw, bbox_outw, poses))

    assert rois.shape == (1, TRAIN_BATCH_SIZE, 5)
    assert labels.shape == (1, TRAIN_BATCH_SIZE)
    assert bbox_targets.shape == (1, TRAIN_BATCH_SIZE, 4)
    assert bbox_inw.shape == (1, TRAIN_BATCH_SIZE, 4)
    assert bbox_outw.shape == (1, TRAIN_BATCH_SIZE, 4)
    assert poses.shape == (1, TRAIN_BATCH_SIZE)
    assert bool(jnp.all(jnp.isfinite(bbox_targets)))
    assert bool(jnp.all((labels >= 0) & (labels < num_classes)))

    print("KERNEL_OK")
</pallas_src>

<mosaic_0001>
module attributes {stable_mosaic.version = 11 : i64} {
  func.func @overlaps_kernel(%arg0: memref<1x4x128xf32, #tpu.memory_space<vmem>>, %arg1: memref<1x20x4xf32, #tpu.memory_space<vmem>>, %arg2: memref<1x8x128xf32, #tpu.memory_space<vmem>>) attributes {dimension_semantics = [], scalar_prefetch = 0 : i64, scratch_operands = 0 : i64, tpu.core_type = #tpu.core_type<tc>} {
    %c0 = arith.constant 0 : index
    %c0_0 = arith.constant 0 : index
    %c0_1 = arith.constant 0 : index
    %0 = vector.load %arg0[%c0, %c0_0, %c0_1] : memref<1x4x128xf32, #tpu.memory_space<vmem>>, vector<1x4x128xf32>
    %c0_2 = arith.constant 0 : index
    %c0_3 = arith.constant 0 : index
    %c0_4 = arith.constant 0 : index
    %1 = vector.load %arg1[%c0_2, %c0_3, %c0_4] : memref<1x20x4xf32, #tpu.memory_space<vmem>>, vector<1x20x4xf32>
    %2 = vector.extract_strided_slice %0 {offsets = [0, 0, 0], sizes = [1, 1, 128], strides = [1, 1, 1]} : vector<1x4x128xf32> to vector<1x1x128xf32>
    %3 = vector.extract_strided_slice %0 {offsets = [0, 1, 0], sizes = [1, 1, 128], strides = [1, 1, 1]} : vector<1x4x128xf32> to vector<1x1x128xf32>
    %4 = vector.extract_strided_slice %0 {offsets = [0, 2, 0], sizes = [1, 1, 128], strides = [1, 1, 1]} : vector<1x4x128xf32> to vector<1x1x128xf32>
    %5 = vector.extract_strided_slice %0 {offsets = [0, 3, 0], sizes = [1, 1, 128], strides = [1, 1, 1]} : vector<1x4x128xf32> to vector<1x1x128xf32>
    %6 = vector.extract_strided_slice %1 {offsets = [0, 0, 0], sizes = [1, 20, 1], strides = [1, 1, 1]} : vector<1x20x4xf32> to vector<1x20x1xf32>
    %7 = vector.extract_strided_slice %1 {offsets = [0, 0, 1], sizes = [1, 20, 1], strides = [1, 1, 1]} : vector<1x20x4xf32> to vector<1x20x1xf32>
    %8 = vector.extract_strided_slice %1 {offsets = [0, 0, 2], sizes = [1, 20, 1], strides = [1, 1, 1]} : vector<1x20x4xf32> to vector<1x20x1xf32>
    %9 = vector.extract_strided_slice %1 {offsets = [0, 0, 3], sizes = [1, 20, 1], strides = [1, 1, 1]} : vector<1x20x4xf32> to vector<1x20x1xf32>
    %10 = arith.subf %4, %2 : vector<1x1x128xf32>
    %cst = arith.constant 1.000000e+00 : f32
    %11 = vector.broadcast %cst : f32 to vector<1x1x128xf32>
    %12 = arith.addf %10, %11 : vector<1x1x128xf32>
    %13 = arith.subf %5, %3 : vector<1x1x128xf32>
    %cst_5 = arith.constant 1.000000e+00 : f32
    %14 = vector.broadcast %cst_5 : f32 to vector<1x1x128xf32>
    %15 = arith.addf %13, %14 : vector<1x1x128xf32>
    %16 = arith.subf %8, %6 : vector<1x20x1xf32>
    %cst_6 = arith.constant 1.000000e+00 : f32
    %17 = vector.broadcast %cst_6 : f32 to vector<1x20x1xf32>
    %18 = arith.addf %16, %17 : vector<1x20x1xf32>
    %19 = arith.subf %9, %7 : vector<1x20x1xf32>
    %cst_7 = arith.constant 1.000000e+00 : f32
    %20 = vector.broadcast %cst_7 : f32 to vector<1x20x1xf32>
    %21 = arith.addf %19, %20 : vector<1x20x1xf32>
    %22 = arith.mulf %12, %15 : vector<1x1x128xf32>
    %23 = arith.mulf %18, %21 : vector<1x20x1xf32>
    %24 = vector.broadcast %4 : vector<1x1x128xf32> to vector<1x20x128xf32>
    %25 = vector.broadcast %8 : vector<1x20x1xf32> to vector<1x20x128xf32>
    %26 = arith.minimumf %24, %25 : vector<1x20x128xf32>
    %27 = vector.broadcast %2 : vector<1x1x128xf32> to vector<1x20x128xf32>
    %28 = vector.broadcast %6 : vector<1x20x1xf32> to vector<1x20x128xf32>
    %29 = arith.maximumf %27, %28 : vector<1x20x128xf32>
    %30 = arith.subf %26, %29 : vector<1x20x128xf32>
    %cst_8 = arith.constant 1.000000e+00 : f32
    %31 = vector.broadcast %cst_8 : f32 to vector<1x20x128xf32>
    %32 = arith.addf %30, %31 : vector<1x20x128xf32>
    %cst_9 = arith.constant 0.000000e+00 : f32
    %33 = vector.broadcast %cst_9 : f32 to vector<1x20x128xf32>
    %34 = arith.maximumf %32, %33 : vector<1x20x128xf32>
    %35 = vector.broadcast %5 : vector<1x1x128xf32> to vector<1x20x128xf32>
    %36 = vector.broadcast %9 : vector<1x20x1xf32> to vector<1x20x128xf32>
    %37 = arith.minimumf %35, %36 : vector<1x20x128xf32>
    %38 = vector.broadcast %3 : vector<1x1x128xf32> to vector<1x20x128xf32>
    %39 = vector.broadcast %7 : vector<1x20x1xf32> to vector<1x20x128xf32>
    %40 = arith.maximumf %38, %39 : vector<1x20x128xf32>
    %41 = arith.subf %37, %40 : vector<1x20x128xf32>
    %cst_10 = arith.constant 1.000000e+00 : f32
    %42 = vector.broadcast %cst_10 : f32 to vector<1x20x128xf32>
    %43 = arith.addf %41, %42 : vector<1x20x128xf32>
    %cst_11 = arith.constant 0.000000e+00 : f32
    %44 = vector.broadcast %cst_11 : f32 to vector<1x20x128xf32>
    %45 = arith.maximumf %43, %44 : vector<1x20x128xf32>
    %46 = arith.mulf %34, %45 : vector<1x20x128xf32>
    %47 = vector.broadcast %22 : vector<1x1x128xf32> to vector<1x20x128xf32>
    %48 = vector.broadcast %23 : vector<1x20x1xf32> to vector<1x20x128xf32>
    %49 = arith.addf %47, %48 : vector<1x20x128xf32>
    %50 = arith.subf %49, %46 : vector<1x20x128xf32>
    %51 = arith.divf %46, %50 : vector<1x20x128xf32>
    %cst_12 = arith.constant 1.000000e+00 : f32
    %52 = vector.broadcast %cst_12 : f32 to vector<1x20x1xf32>
    %53 = arith.cmpf oeq, %18, %52 : vector<1x20x1xf32>
    %cst_13 = arith.constant 1.000000e+00 : f32
    %54 = vector.broadcast %cst_13 : f32 to vector<1x20x1xf32>
    %55 = arith.cmpf oeq, %21, %54 : vector<1x20x1xf32>
    %56 = arith.andi %53, %55 : vector<1x20x1xi1>
    %cst_14 = arith.constant 1.000000e+00 : f32
    %57 = vector.broadcast %cst_14 : f32 to vector<1x1x128xf32>
    %58 = arith.cmpf oeq, %12, %57 : vector<1x1x128xf32>
    %cst_15 = arith.constant 1.000000e+00 : f32
    %59 = vector.broadcast %cst_15 : f32 to vector<1x1x128xf32>
    %60 = arith.cmpf oeq, %15, %59 : vector<1x1x128xf32>
    %61 = arith.andi %58, %60 : vector<1x1x128xi1>
    %cst_16 = arith.constant 0.000000e+00 : f32
    %62 = vector.shape_cast %56 : vector<1x20x1xi1> to vector<1x20x1xi1>
    %63 = vector.broadcast %62 : vector<1x20x1xi1> to vector<1x20x128xi1>
    %64 = vector.broadcast %cst_16 : f32 to vector<1x20x128xf32>
    %65 = arith.select %63, %64, %51 : vector<1x20x128xi1>, vector<1x20x128xf32>
    %cst_17 = arith.constant -1.000000e+00 : f32
    %66 = vector.shape_cast %61 : vector<1x1x128xi1> to vector<1x1x128xi1>
    %67 = vector.broadcast %66 : vector<1x1x128xi1> to vector<1x20x128xi1>
    %68 = vector.broadcast %cst_17 : f32 to vector<1x20x128xf32>
    %69 = arith.select %67, %68, %65 : vector<1x20x128xi1>, vector<1x20x128xf32>
    %cst_18 = arith.constant dense<0xFF800000> : vector<1x128xf32>
    %70 = vector.multi_reduction <maximumf>, %69, %cst_18 [1] : vector<1x20x128xf32> to vector<1x128xf32>
    %71 = vector.shape_cast %70 : vector<1x128xf32> to vector<1x1x128xf32>
    %72 = tpu.iota {dimensions = array<i32: 1>} : vector<1x20x128xi32>
    %73 = vector.broadcast %71 : vector<1x1x128xf32> to vector<1x20x128xf32>
    %74 = arith.cmpf oeq, %69, %73 : vector<1x20x128xf32>
    %c20_i32 = arith.constant 20 : i32
    %75 = vector.broadcast %c20_i32 : i32 to vector<1x20x128xi32>
    %76 = arith.select %74, %72, %75 : vector<1x20x128xi1>, vector<1x20x128xi32>
    %cst_19 = arith.constant dense<2147483647> : vector<1x128xi32>
    %77 = vector.multi_reduction <minsi>, %76, %cst_19 [1] : vector<1x20x128xi32> to vector<1x128xi32>
    %78 = vector.shape_cast %77 : vector<1x128xi32> to vector<1x1x128xi32>
    %c19_i32 = arith.constant 19 : i32
    %79 = vector.broadcast %c19_i32 : i32 to vector<1x1x128xi32>
    %80 = arith.minsi %78, %79 : vector<1x1x128xi32>
    %81 = arith.sitofp %80 : vector<1x1x128xi32> to vector<1x1x128xf32>
    %cst_20 = arith.constant 0.000000e+00 : f32
    %82 = vector.broadcast %cst_20 : f32 to vector<1x6x128xf32>
    %83 = tpu.concatenate %71, %81, %82 in 1 : vector<1x1x128xf32>, vector<1x1x128xf32>, vector<1x6x128xf32> -> vector<1x8x128xf32>
    %c0_21 = arith.constant 0 : index
    %c0_22 = arith.constant 0 : index
    %c0_23 = arith.constant 0 : index
    %84 = vector.load %arg2[%c0_21, %c0_22, %c0_23] : memref<1x8x128xf32, #tpu.memory_space<vmem>>, vector<1x8x128xf32>
    tpu.vector_store %arg2[%c0_21, %c0_22, %c0_23], %83 {strides = array<i32>} : memref<1x8x128xf32, #tpu.memory_space<vmem>>, vector<1x8x128xf32>,
    return
  }
}

module attributes {stable_mosaic.version = 11 : i64} {
  func.func @targets_kernel(%arg0: memref<1x16x128xf32, #tpu.memory_space<vmem>>, %arg1: memref<1x16x128xf32, #tpu.memory_space<vmem>>) attributes {dimension_semantics = [], scalar_prefetch = 0 : i64, scratch_operands = 0 : i64, tpu.core_type = #tpu.core_type<tc>} {
    %c0 = arith.constant 0 : index
    %c0_0 = arith.constant 0 : index
    %c0_1 = arith.constant 0 : index
    %0 = vector.load %arg0[%c0, %c0_0, %c0_1] : memref<1x16x128xf32, #tpu.memory_space<vmem>>, vector<1x16x128xf32>
    %1 = vector.extract_strided_slice %0 {offsets = [0, 0, 0], sizes = [1, 1, 128], strides = [1, 1, 1]} : vector<1x16x128xf32> to vector<1x1x128xf32>
    %2 = vector.extract_strided_slice %0 {offsets = [0, 1, 0], sizes = [1, 1, 128], strides = [1, 1, 1]} : vector<1x16x128xf32> to vector<1x1x128xf32>
    %3 = vector.extract_strided_slice %0 {offsets = [0, 2, 0], sizes = [1, 1, 128], strides = [1, 1, 1]} : vector<1x16x128xf32> to vector<1x1x128xf32>
    %4 = vector.extract_strided_slice %0 {offsets = [0, 3, 0], sizes = [1, 1, 128], strides = [1, 1, 1]} : vector<1x16x128xf32> to vector<1x1x128xf32>
    %5 = vector.extract_strided_slice %0 {offsets = [0, 4, 0], sizes = [1, 1, 128], strides = [1, 1, 1]} : vector<1x16x128xf32> to vector<1x1x128xf32>
    %6 = vector.extract_strided_slice %0 {offsets = [0, 5, 0], sizes = [1, 1, 128], strides = [1, 1, 1]} : vector<1x16x128xf32> to vector<1x1x128xf32>
    %7 = vector.extract_strided_slice %0 {offsets = [0, 6, 0], sizes = [1, 1, 128], strides = [1, 1, 1]} : vector<1x16x128xf32> to vector<1x1x128xf32>
    %8 = vector.extract_strided_slice %0 {offsets = [0, 7, 0], sizes = [1, 1, 128], strides = [1, 1, 1]} : vector<1x16x128xf32> to vector<1x1x128xf32>
    %9 = vector.extract_strided_slice %0 {offsets = [0, 8, 0], sizes = [1, 1, 128], strides = [1, 1, 1]} : vector<1x16x128xf32> to vector<1x1x128xf32>
    %10 = arith.subf %3, %1 : vector<1x1x128xf32>
    %cst = arith.constant 1.000000e+00 : f32
    %11 = vector.broadcast %cst : f32 to vector<1x1x128xf32>
    %12 = arith.addf %10, %11 : vector<1x1x128xf32>
    %13 = arith.subf %4, %2 : vector<1x1x128xf32>
    %cst_2 = arith.constant 1.000000e+00 : f32
    %14 = vector.broadcast %cst_2 : f32 to vector<1x1x128xf32>
    %15 = arith.addf %13, %14 : vector<1x1x128xf32>
    %cst_3 = arith.constant 5.000000e-01 : f32
    %16 = vector.broadcast %cst_3 : f32 to vector<1x1x128xf32>
    %17 = arith.mulf %16, %12 : vector<1x1x128xf32>
    %18 = arith.addf %1, %17 : vector<1x1x128xf32>
    %cst_4 = arith.constant 5.000000e-01 : f32
    %19 = vector.broadcast %cst_4 : f32 to vector<1x1x128xf32>
    %20 = arith.mulf %19, %15 : vector<1x1x128xf32>
    %21 = arith.addf %2, %20 : vector<1x1x128xf32>
    %22 = arith.subf %7, %5 : vector<1x1x128xf32>
    %cst_5 = arith.constant 1.000000e+00 : f32
    %23 = vector.broadcast %cst_5 : f32 to vector<1x1x128xf32>
    %24 = arith.addf %22, %23 : vector<1x1x128xf32>
    %25 = arith.subf %8, %6 : vector<1x1x128xf32>
    %cst_6 = arith.constant 1.000000e+00 : f32
    %26 = vector.broadcast %cst_6 : f32 to vector<1x1x128xf32>
    %27 = arith.addf %25, %26 : vector<1x1x128xf32>
    %cst_7 = arith.constant 5.000000e-01 : f32
    %28 = vector.broadcast %cst_7 : f32 to vector<1x1x128xf32>
    %29 = arith.mulf %28, %24 : vector<1x1x128xf32>
    %30 = arith.addf %5, %29 : vector<1x1x128xf32>
    %cst_8 = arith.constant 5.000000e-01 : f32
    %31 = vector.broadcast %cst_8 : f32 to vector<1x1x128xf32>
    %32 = arith.mulf %31, %27 : vector<1x1x128xf32>
    %33 = arith.addf %6, %32 : vector<1x1x128xf32>
    %34 = arith.subf %30, %18 : vector<1x1x128xf32>
    %35 = arith.divf %34, %12 : vector<1x1x128xf32>
    %cst_9 = arith.constant 0.000000e+00 : f32
    %36 = vector.broadcast %cst_9 : f32 to vector<1x1x128xf32>
    %37 = arith.subf %35, %36 : vector<1x1x128xf32>
    %cst_10 = arith.constant 1.000000e+01 : f32
    %38 = vector.broadcast %cst_10 : f32 to vector<1x1x128xf32>
    %39 = arith.mulf %37, %38 : vector<1x1x128xf32>
    %40 = arith.subf %33, %21 : vector<1x1x128xf32>
    %41 = arith.divf %40, %15 : vector<1x1x128xf32>
    %cst_11 = arith.constant 0.000000e+00 : f32
    %42 = vector.broadcast %cst_11 : f32 to vector<1x1x128xf32>
    %43 = arith.subf %41, %42 : vector<1x1x128xf32>
    %cst_12 = arith.constant 1.000000e+01 : f32
    %44 = vector.broadcast %cst_12 : f32 to vector<1x1x128xf32>
    %45 = arith.mulf %43, %44 : vector<1x1x128xf32>
    %46 = arith.divf %24, %12 : vector<1x1x128xf32>
    %47 = math.log %46 : vector<1x1x128xf32>
    %cst_13 = arith.constant 0.000000e+00 : f32
    %48 = vector.broadcast %cst_13 : f32 to vector<1x1x128xf32>
    %49 = arith.subf %47, %48 : vector<1x1x128xf32>
    %cst_14 = arith.constant 5.000000e+00 : f32
    %50 = vector.broadcast %cst_14 : f32 to vector<1x1x128xf32>
    %51 = arith.mulf %49, %50 : vector<1x1x128xf32>
    %52 = arith.divf %27, %15 : vector<1x1x128xf32>
    %53 = math.log %52 : vector<1x1x128xf32>
    %cst_15 = arith.constant 0.000000e+00 : f32
    %54 = vector.broadcast %cst_15 : f32 to vector<1x1x128xf32>
    %55 = arith.subf %53, %54 : vector<1x1x128xf32>
    %cst_16 = arith.constant 5.000000e+00 : f32
    %56 = vector.broadcast %cst_16 : f32 to vector<1x1x128xf32>
    %57 = arith.mulf %55, %56 : vector<1x1x128xf32>
    %cst_17 = arith.constant 0.000000e+00 : f32
    %58 = vector.broadcast %cst_17 : f32 to vector<1x1x128xf32>
    %59 = arith.cmpf ogt, %9, %58 : vector<1x1x128xf32>
    %60 = arith.extui %59 : vector<1x1x128xi1> to vector<1x1x128xi32>
    %61 = arith.sitofp %60 : vector<1x1x128xi32> to vector<1x1x128xf32>
    %62 = tpu.concatenate %39, %45, %51, %57 in 1 : vector<1x1x128xf32>, vector<1x1x128xf32>, vector<1x1x128xf32>, vector<1x1x128xf32> -> vector<1x4x128xf32>
    %63 = vector.broadcast %61 : vector<1x1x128xf32> to vector<1x4x128xf32>
    %64 = arith.mulf %62, %63 : vector<1x4x128xf32>
    %cst_18 = arith.constant 1.000000e+00 : f32
    %65 = vector.broadcast %cst_18 : f32 to vector<1x1x128xf32>
    %66 = arith.mulf %61, %65 : vector<1x1x128xf32>
    %cst_19 = arith.constant 1.000000e+00 : f32
    %67 = vector.broadcast %cst_19 : f32 to vector<1x1x128xf32>
    %68 = arith.mulf %61, %67 : vector<1x1x128xf32>
    %cst_20 = arith.constant 1.000000e+00 : f32
    %69 = vector.broadcast %cst_20 : f32 to vector<1x1x128xf32>
    %70 = arith.mulf %61, %69 : vector<1x1x128xf32>
    %cst_21 = arith.constant 1.000000e+00 : f32
    %71 = vector.broadcast %cst_21 : f32 to vector<1x1x128xf32>
    %72 = arith.mulf %61, %71 : vector<1x1x128xf32>
    %73 = tpu.concatenate %66, %68, %70, %72 in 1 : vector<1x1x128xf32>, vector<1x1x128xf32>, vector<1x1x128xf32>, vector<1x1x128xf32> -> vector<1x4x128xf32>
    %cst_22 = arith.constant 0.000000e+00 : f32
    %74 = vector.broadcast %cst_22 : f32 to vector<1x4x128xf32>
    %75 = arith.cmpf ogt, %73, %74 : vector<1x4x128xf32>
    %76 = arith.extui %75 : vector<1x4x128xi1> to vector<1x4x128xi32>
    %77 = arith.sitofp %76 : vector<1x4x128xi32> to vector<1x4x128xf32>
    %cst_23 = arith.constant 0.000000e+00 : f32
    %78 = vector.broadcast %cst_23 : f32 to vector<1x4x128xf32>
    %79 = tpu.concatenate %64, %73, %77, %78 in 1 : vector<1x4x128xf32>, vector<1x4x128xf32>, vector<1x4x128xf32>, vector<1x4x128xf32> -> vector<1x16x128xf32>
    %c0_24 = arith.constant 0 : index
    %c0_25 = arith.constant 0 : index
    %c0_26 = arith.constant 0 : index
    %80 = vector.load %arg1[%c0_24, %c0_25, %c0_26] : memref<1x16x128xf32, #tpu.memory_space<vmem>>, vector<1x16x128xf32>
    tpu.vector_store %arg1[%c0_24, %c0_25, %c0_26], %79 {strides = array<i32>} : memref<1x16x128xf32, #tpu.memory_space<vmem>>, vector<1x16x128xf32>,
    return
  }
}

</mosaic_0001>

<llo_original>
// kernel: _proposal_target_forward.4
$region0: #{_proposal_target_forward.4}
  #allocation0 [shape = 'u32[]', space=smem, size = 0x4, offset = 0x4, fixed_abs, tag = 'smem constant byte address 0x4 - core index']
  #allocation1 [shape = 'u32[144,128]{1,0:T(1,128)}', space=vmem, size = 0x12000, scoped, tag = 'internal scratch']
  %s0 = inlined_call_operand.vmem [shape: f32[1,4,128], index: 0, kind: input, shape index: {}]
  %s1 = inlined_call_operand.vmem [shape: f32[1,20,4], index: 1, kind: input, shape index: {}]
  %s2 = inlined_call_operand.vmem [shape: f32[1,8,128], index: 2, kind: output, shape index: {}]
  %s3 = sld [smem:[#allocation0]]
  $region18: #{_proposal_target_forward.4} parent=0
    _
  %s5 = ssub.s32 1, %s3
  %s6 = scalar_select 0, %s5, %s3
  // Predicated region
  $region2: #{_proposal_target_forward.4} parent=0 // pred_check
    _
  $region3: #{_proposal_target_forward.4} parent=0 // pred_check_branch
    %8 = sbr.rel (0) target = $region5
  $region4: #{_proposal_target_forward.4} parent=0 // pred_region
    _
  $region5: #{_proposal_target_forward.4} parent=0 // pred_fallthru
    _
  // Predicated region
  $region6: #{_proposal_target_forward.4} parent=0 // pred_check
    _
  $region7: #{_proposal_target_forward.4} parent=0 // pred_check_branch
    %10 = sbr.rel (0) target = $region9
  $region8: #{_proposal_target_forward.4} parent=0 // pred_region
    _
  $region9: #{_proposal_target_forward.4} parent=0 // pred_fallthru
    _
  %v11 = vld [vmem:[%s0] sm:$0xf]
  %v12 = vld [vmem:[%s1] sm:$0xff]
  %v13 = vld [vmem:[%s1 + $0x8] sm:$0xff]
  %v14 = vld [vmem:[%s1 + $0x10] sm:$0xf]
  %v16 = vrot.slane %v11, 6
  %v18 = vsub.f32 %v11, %v16
  %v19 = vadd.f32 %v18, 1.0
  %23 = vrot.lane.b32.xlu0 %v12, 2
  %v24 = vpop.permute.xlu0 %23
  %25 = vrot.lane.b32.xlu0 %v13, 2
  %v26 = vpop.permute.xlu0 %25
  %27 = vrot.lane.b32.xlu0 %v14, 2
  %v28 = vpop.permute.xlu0 %27
  %v32 = vsub.f32 %v12, %v24
  %v33 = vsub.f32 %v13, %v26
  %v34 = vsub.f32 %v14, %v28
  %v35 = vadd.f32 %v32, 1.0
  %v36 = vadd.f32 %v33, 1.0
  %v37 = vadd.f32 %v34, 1.0
  %v39 = vrot.slane %v19, 1
  %v41 = vmul.f32 %v19, %v39
  %45 = vrot.lane.b32.xlu0 %v35, 127
  %v46 = vpop.permute.xlu0 %45
  %47 = vrot.lane.b32.xlu0 %v36, 127
  %v48 = vpop.permute.xlu0 %47
  %49 = vrot.lane.b32.xlu0 %v37, 127
  %v50 = vpop.permute.xlu0 %49
  %v54 = vmul.f32 %v35, %v46
  %v55 = vmul.f32 %v36, %v48
  %v56 = vmul.f32 %v37, %v50
  %v57 = vlaneseq
  %v58 = vshrl.u32 %v57, 7
  %v59 = vsub.s32 2, %v58
  %v60 = vrot.slane %v11, %v59
  %61 = vset.pattern.permute.xlu0 2
  %62 = vperm.xlu0 %61, %v12
  %v63 = vpop.permute.xlu0 %62
  %65 = vset.pattern.permute.xlu0 2
  %66 = vperm.xlu0 %65, %v13
  %v67 = vpop.permute.xlu0 %66
  %69 = vset.pattern.permute.xlu0 2
  %70 = vperm.xlu0 %69, %v14
  %v71 = vpop.permute.xlu0 %70
  %v73 = vmin.f32 %v60, %v63
  %v74 = vmin.f32 %v60, %v67
  %v75 = vmin.f32 %v60, %v71
  %v76 = vlaneseq
  %v77 = vshrl.u32 %v76, 7
  %v78 = vsub.s32 0, %v77
  %v79 = vrot.slane %v11, %v78
  %80 = vset.pattern.permute.xlu0 0
  %81 = vperm.xlu0 %80, %v12
  %v82 = vpop.permute.xlu0 %81
  %84 = vset.pattern.permute.xlu0 0
  %85 = vperm.xlu0 %84, %v13
  %v86 = vpop.permute.xlu0 %85
  %88 = vset.pattern.permute.xlu0 0
  %89 = vperm.xlu0 %88, %v14
  %v90 = vpop.permute.xlu0 %89
  %v92 = vmax.f32 %v79, %v82
  %v93 = vmax.f32 %v79, %v86
  %v94 = vmax.f32 %v79, %v90
  %v95 = vsub.f32 %v73, %v92
  %v96 = vsub.f32 %v74, %v93
  %v97 = vsub.f32 %v75, %v94
  %v98 = vadd.f32 %v95, 1.0
  %v99 = vadd.f32 %v96, 1.0
  %v100 = vadd.f32 %v97, 1.0
  %v101 = vmax.f32 %v98, 0.0
  %v102 = vmax.f32 %v99, 0.0
  %v103 = vmax.f32 %v100, 0.0
  %v104 = vlaneseq
  %v105 = vshrl.u32 %v104, 7
  %v106 = vsub.s32 3, %v105
  %v107 = vrot.slane %v11, %v106
  %108 = vset.pattern.permute.xlu0 3
  %109 = vperm.xlu0 %108, %v12
  %v110 = vpop.permute.xlu0 %109
  %112 = vset.pattern.permute.xlu0 3
  %113 = vperm.xlu0 %112, %v13
  %v114 = vpop.permute.xlu0 %113
  %116 = vset.pattern.permute.xlu0 3
  %117 = vperm.xlu0 %116, %v14
  %v118 = vpop.permute.xlu0 %117
  %v120 = vmin.f32 %v107, %v110
  %v121 = vmin.f32 %v107, %v114
  %v122 = vmin.f32 %v107, %v118
  %v123 = vlaneseq
  %v124 = vshrl.u32 %v123, 7
  %v125 = vsub.s32 1, %v124
  %v126 = vrot.slane %v11, %v125
  %127 = vset.pattern.permute.xlu0 1
  %128 = vperm.xlu0 %127, %v12
  %v129 = vpop.permute.xlu0 %128
  %131 = vset.pattern.permute.xlu0 1
  %132 = vperm.xlu0 %131, %v13
  %v133 = vpop.permute.xlu0 %132
  %135 = vset.pattern.permute.xlu0 1
  %136 = vperm.xlu0 %135, %v14
  %v137 = vpop.permute.xlu0 %136
  %v139 = vmax.f32 %v126, %v129
  %v140 = vmax.f32 %v126, %v133
  %v141 = vmax.f32 %v126, %v137
  %v142 = vsub.f32 %v120, %v139
  %v143 = vsub.f32 %v121, %v140
  %v144 = vsub.f32 %v122, %v141
  %v145 = vadd.f32 %v142, 1.0
  %v146 = vadd.f32 %v143, 1.0
  %v147 = vadd.f32 %v144, 1.0
  %v148 = vmax.f32 %v145, 0.0
  %v149 = vmax.f32 %v146, 0.0
  %v150 = vmax.f32 %v147, 0.0
  %v151 = vmul.f32 %v101, %v148
  %v152 = vmul.f32 %v102, %v149
  %v153 = vmul.f32 %v103, %v150
  %v154 = vlaneseq
  %v155 = vshrl.u32 %v154, 7
  %v156 = vsub.s32 2, %v155
  %v157 = vrot.slane %v41, %v156
  %159 = vset.pattern.permute.xlu0 2
  %160 = vperm.xlu0 %159, %v54
  %v161 = vpop.permute.xlu0 %160
  %164 = vset.pattern.permute.xlu0 2
  %165 = vperm.xlu0 %164, %v55
  %v166 = vpop.permute.xlu0 %165
  %169 = vset.pattern.permute.xlu0 2
  %170 = vperm.xlu0 %169, %v56
  %v171 = vpop.permute.xlu0 %170
  %v173 = vadd.f32 %v157, %v161
  %v174 = vadd.f32 %v157, %v166
  %v175 = vadd.f32 %v157, %v171
  %v176 = vsub.f32 %v173, %v151
  %v177 = vsub.f32 %v174, %v152
  %v178 = vsub.f32 %v175, %v153
  %v179 = vrcp.pop %v176
  %v180 = vmul.f32 %v151, %v179
  %v181 = vrcp.pop %v177
  %v182 = vmul.f32 %v152, %v181
  %v183 = vrcp.pop %v178
  %v184 = vmul.f32 %v153, %v183
  %vm185 = vcmp.eq.f32.partialorder %v35, 1.0
  %vm186 = vcmp.eq.f32.partialorder %v36, 1.0
  %vm187 = vcmp.eq.f32.partialorder %v37, 1.0
  %v188 = vsel %vm185, 1, 0
  %v189 = vsel %vm186, 1, 0
  %v190 = vsel %vm187, 1, 0
  %191 = vrot.lane.b32.xlu0 %v188, 127
  %v192 = vpop.permute.xlu0 %191
  %193 = vrot.lane.b32.xlu0 %v189, 127
  %v194 = vpop.permute.xlu0 %193
  %195 = vrot.lane.b32.xlu0 %v190, 127
  %v196 = vpop.permute.xlu0 %195
  %vm197 = vcmp.ne.s32.totalorder %v192, 0
  %vm198 = vcmp.ne.s32.totalorder %v194, 0
  %vm199 = vcmp.ne.s32.totalorder %v196, 0
  %vm200 = vmand %vm185, %vm197
  %vm201 = vmand %vm186, %vm198
  %vm202 = vmand %vm187, %vm199
  %vm203 = vcmp.eq.f32.partialorder %v19, 1.0
  %v204 = vsel %vm203, 1, 0
  %v205 = vrot.slane %v204, 1
  %vm206 = vcmp.ne.s32.totalorder %v205, 0
  %vm207 = vmand %vm203, %vm206
  %v208 = vsel %vm200, 1, 0
  %v209 = vsel %vm201, 1, 0
  %v210 = vsel %vm202, 1, 0
  %211 = vset.pattern.permute.xlu0 2
  %212 = vperm.xlu0 %211, %v208
  %v213 = vpop.permute.xlu0 %212
  %214 = vset.pattern.permute.xlu0 2
  %215 = vperm.xlu0 %214, %v209
  %v216 = vpop.permute.xlu0 %215
  %217 = vset.pattern.permute.xlu0 2
  %218 = vperm.xlu0 %217, %v210
  %v219 = vpop.permute.xlu0 %218
  %vm220 = vcmp.eq.s32.totalorder %v213, 1
  %vm221 = vcmp.eq.s32.totalorder %v216, 1
  %vm222 = vcmp.eq.s32.totalorder %v219, 1
  %v223 = vsel %vm220, 0.0, %v180
  %v224 = vsel %vm221, 0.0, %v182
  %v225 = vsel %vm222, 0.0, %v184
  %v226 = vsel %vm207, 1, 0
  %v227 = vlaneseq
  %v228 = vshrl.u32 %v227, 7
  %v229 = vsub.s32 2, %v228
  %v230 = vrot.slane %v226, %v229
  %vm231 = vcmp.eq.s32.totalorder %v230, 1
  %v232 = vsel %vm231, -1.0, %v223
  %v233 = vsel %vm231, -1.0, %v224
  %v234 = vsel %vm231, -1.0, %v225
  %vm235 = vcmask 1043456
  %v236 = vsel %vm235, %v234, -inf
  %v237 = vmax.f32 %v232, %v233
  %v238 = vmax.f32 %v237, %v236
  %v239 = vrot.slane %v238, 4
  %v240 = vmax.f32 %v238, %v239
  %v241 = vrot.slane %v240, 2
  %v242 = vmax.f32 %v240, %v241
  %v243 = vrot.slane %v242, 1
  %v244 = vmax.f32 %v242, %v243
  %v245 = vlaneseq
  %v246 = vshrl.u32 %v245, 7
  %v247 = vadd.s32 %v246, 8
  %v248 = vadd.s32 %v246, 16
  %vm249 = vcmp.eq.f32.partialorder %v232, %v244
  %vm250 = vcmp.eq.f32.partialorder %v233, %v244
  %vm251 = vcmp.eq.f32.partialorder %v234, %v244
  %v252 = vsel %vm249, %v246, 20
  %v253 = vsel %vm250, %v247, 20
  %v254 = vsel %vm251, %v248, 20
  %v255 = vsel %vm235, %v254, 2147483647
  %vm256 = vcmp.lt.s32.totalorder %v252, %v253
  %v257 = vsel %vm256, %v252, %v253
  %vm258 = vcmp.lt.s32.totalorder %v257, %v255
  %v259 = vsel %vm258, %v257, %v255
  %v260 = vrot.slane %v259, 4
  %vm261 = vcmp.lt.s32.totalorder %v259, %v260
  %v262 = vsel %vm261, %v259, %v260
  %v263 = vrot.slane %v262, 2
  %vm264 = vcmp.lt.s32.totalorder %v262, %v263
  %v265 = vsel %vm264, %v262, %v263
  %v266 = vrot.slane %v265, 1
  %vm267 = vcmp.lt.s32.totalorder %v265, %v266
  %v268 = vsel %vm267, %v265, %v266
  %vm269 = vcmp.lt.s32.totalorder %v268, 19
  %v270 = vsel %vm269, %v268, 19
  %v271 = vcvt.s32.f32 %v270
  %vm272 = vcmask 1040384
  %v273 = vsel %vm272, %v244, %v271
  %vm274 = vcmask 1041408
  %v275 = vsel %vm274, %v273, 0.0
  %276 = vst [vmem:[%s2] sm:$0xff] %v275
  // Predicated region
  $region10: #{_proposal_target_forward.4} parent=0 // pred_check
    _
  $region11: #{_proposal_target_forward.4} parent=0 // pred_check_branch
    %278 = sbr.rel (0) target = $region13
  $region12: #{_proposal_target_forward.4} parent=0 // pred_region
    _
  $region13: #{_proposal_target_forward.4} parent=0 // pred_fallthru
    _
  // Predicated region
  $region14: #{_proposal_target_forward.4} parent=0 // pred_check
    _
  $region15: #{_proposal_target_forward.4} parent=0 // pred_check_branch
    %280 = sbr.rel (0) target = $region17
  $region16: #{_proposal_target_forward.4} parent=0 // pred_region
    _
  $region17: #{_proposal_target_forward.4} parent=0 // pred_fallthru
    _

// kernel: _proposal_target_forward.5
$region0: #{_proposal_target_forward.5}
  #allocation0 [shape = 'u32[]', space=smem, size = 0x4, offset = 0x4, fixed_abs, tag = 'smem constant byte address 0x4 - core index']
  #allocation1 [shape = 'u32[144,128]{1,0:T(1,128)}', space=vmem, size = 0x12000, scoped, tag = 'internal scratch']
  %s0 = inlined_call_operand.vmem [shape: f32[1,16,128], index: 0, kind: input, shape index: {}]
  %s1 = inlined_call_operand.vmem [shape: f32[1,16,128], index: 1, kind: output, shape index: {}]
  %s2 = sld [smem:[#allocation0]]
  $region14: #{_proposal_target_forward.5} parent=0
    _
  %s4 = ssub.s32 1, %s2
  %s5 = scalar_select 0, %s4, %s2
  // Predicated region
  $region2: #{_proposal_target_forward.5} parent=0 // pred_check
    _
  $region3: #{_proposal_target_forward.5} parent=0 // pred_check_branch
    %7 = sbr.rel (0) target = $region5
  $region4: #{_proposal_target_forward.5} parent=0 // pred_region
    _
  $region5: #{_proposal_target_forward.5} parent=0 // pred_fallthru
    _
  %v8 = vld [vmem:[%s0] sm:$0xff]
  %v9 = vld [vmem:[%s0 + $0x8] sm:$0xff]
  %v11 = vrot.slane %v8, 6
  %v13 = vsub.f32 %v8, %v11
  %v14 = vadd.f32 %v13, 1.0
  %v15 = vmul.f32 %v14, 0.5
  %v17 = vrot.slane %v15, 2
  %v19 = vadd.f32 %v8, %v17
  %v21 = vrot.slane %v19, 4
  %v23 = vsub.f32 %v19, %v21
  %v25 = vrot.slane %v14, 6
  %v27 = vrcp.pop %v25
  %v28 = vmul.f32 %v23, %v27
  %v29 = vmul.f32 %v28, 10.0
  %v30 = vrot.slane %v14, 4
  %v32 = vrcp.pop %v30
  %v33 = vmul.f32 %v14, %v32
  %v34 = vlog2.pop %v33
  %v35 = vmul.f32 %v34, 0.6931472
  %v36 = vmul.f32 %v35, 5.0
  %vm37 = vcmp.gt.f32.partialorder %v9, 0.0
  %v38 = vsel %vm37, 1, 0
  %v39 = vcvt.s32.f32 %v38
  %v41 = vrot.slane %v29, 4
  %v44 = vrot.slane %v36, 4
  %vm46 = vcmask 1040384
  %vm47 = vcmask 1041408
  %v48 = vsel %vm47, %v41, %v44
  %vm49 = vcmask 1042432
  %v50 = vsel %vm49, %v48, %v44
  %v51 = vlaneseq
  %v52 = vshrl.u32 %v51, 7
  %v53 = vsub.s32 0, %v52
  %v54 = vrot.slane %v39, %v53
  %v55 = vmul.f32 %v50, %v54
  %v57 = vrot.slane %v39, 7
  %v59 = vrot.slane %v39, 6
  %v61 = vrot.slane %v39, 5
  %v63 = vsel %vm46, %v39, %v57
  %v64 = vsel %vm47, %v63, %v59
  %v65 = vsel %vm49, %v64, %v61
  %vm66 = vcmp.gt.f32.partialorder %v65, 0.0
  %v67 = vsel %vm66, 1, 0
  %v68 = vcvt.s32.f32 %v67
  %v70 = vrot.slane %v65, 4
  %vm72 = vcmask 1043456
  %v73 = vsel %vm72, %v55, %v70
  %v74 = vsel %vm72, %v68, 0.0
  %75 = vst [vmem:[%s1] sm:$0xff] %v73
  %76 = vst [vmem:[%s1 + $0x8] sm:$0xff] %v74
  // Predicated region
  $region6: #{_proposal_target_forward.5} parent=0 // pred_check
    _
  $region7: #{_proposal_target_forward.5} parent=0 // pred_check_branch
    %78 = sbr.rel (0) target = $region9
  $region8: #{_proposal_target_forward.5} parent=0 // pred_region
    _
  $region9: #{_proposal_target_forward.5} parent=0 // pred_fallthru
    _
  // Predicated region
  $region10: #{_proposal_target_forward.5} parent=0 // pred_check
    _
  $region11: #{_proposal_target_forward.5} parent=0 // pred_check_branch
    %80 = sbr.rel (0) target = $region13
  $region12: #{_proposal_target_forward.5} parent=0 // pred_region
    _
  $region13: #{_proposal_target_forward.5} parent=0 // pred_fallthru
    _

</llo_original>
